<compile_context>
chip_gen: v7x
topology: tpu7x:2x2x1
jax: 0.10.0
libtpu: 0.0.40
codegen_flags: <defaults>
</compile_context>

<pallas_src>
import math

import jax
import jax.numpy as jnp
from jax.experimental import pallas as pl
from jax.experimental.pallas import tpu as pltpu


def mlp_kernel(x_ref, w1_ref, b1_ref, w2_ref, b2_ref, w3_ref, b3_ref,
               w4_ref, b4_ref, o_ref):
    """One batch tile of the fused 4-layer MLP, batch on the lane axis.

    x_ref : (TILE_B, 300) native dtype -- dominant HBM stream
    w*_ref: (out, in) bf16 weights, VMEM-resident (constant index_map)
    b*_ref: (out, 1)  f32 biases, broadcast along the lane (batch) axis
    o_ref : (1, TILE_B) f32 -- lane-dense output row
    """
    # In-kernel bf16 cast of x (free VPU work hidden under the DMA).
    x = x_ref[...].astype(jnp.bfloat16)                      # (TILE_B, 300)

    # Layer 1: W1 (20,300) contracted with x (TILE_B,300) on their last ('in')
    # dims -> (20, TILE_B): batch lands on the lane axis from the start.
    z1 = jax.lax.dot_general(
        w1_ref[...], x, dimension_numbers=(((1,), (1,)), ((), ())),
        preferred_element_type=jnp.float32)                  # (20, TILE_B)
    h1 = jax.nn.sigmoid(z1 + b1_ref[...]).astype(jnp.bfloat16)

    # Layer 2: 20 -> 10
    z2 = jnp.dot(w2_ref[...], h1, preferred_element_type=jnp.float32)
    h2 = jax.nn.sigmoid(z2 + b2_ref[...]).astype(jnp.bfloat16)   # (10, TILE_B)

    # Layer 3: 10 -> 4
    z3 = jnp.dot(w3_ref[...], h2, preferred_element_type=jnp.float32)
    h3 = jax.nn.sigmoid(z3 + b3_ref[...]).astype(jnp.bfloat16)   # (4, TILE_B)

    # Output layer 4 -> 1: ordinary tiny matmul, already lane-dense.
    # b4 is (1,1) and broadcasts against the (1, TILE_B) pre-activation.
    z4 = jnp.dot(w4_ref[...], h3, preferred_element_type=jnp.float32)
    o_ref[...] = jax.nn.sigmoid(z4 + b4_ref[...])            # (1, TILE_B) f32


def _default_tile_b():
    """Generation-aware default batch tile (4096 on v5e/older, 8192 on v6e/v7x)."""
    try:
        kind = jax.devices()[0].device_kind.lower()
    except Exception:
        return 4096
    if "v6" in kind or "v7" in kind:
        return 8192
    return 4096


def neural_network_forward(x, params, tile_b=None):
    """x: [B, input_nodes] (f32 or bf16); returns [B, 1] f32 sigmoid outputs."""
    B, F = x.shape

    if tile_b is None:
        tile_b = _default_tile_b()
    tile_b = max(128, (int(tile_b) // 128) * 128)

    # Tile selection:
    #  * B <= 128: one full-array block (block_shape == array shape, any size OK).
    #  * B  > 128: lane-aligned (multiple-of-128) tiles, at least 2 of them so
    #    both v7x TensorCores get work; ragged last tile handled by Pallas
    #    boundary-block clipping (no jnp.pad / extra HBM pass).
    if B <= 128:
        tile = B
    else:
        half = -(-B // 2)                    # ceil(B / 2)
        half = -(-half // 128) * 128         # round up to a multiple of 128
        tile = min(tile_b, half)
    n_tiles = -(-B // tile)

    # bf16 MXU operands; biases stay f32 (they add into the f32 accumulator).
    w1 = params["w1"].astype(jnp.bfloat16)   # (20, 300)  PyTorch (out, in)
    w2 = params["w2"].astype(jnp.bfloat16)   # (10, 20)
    w3 = params["w3"].astype(jnp.bfloat16)   # (4, 10)
    w4 = params["w4"].astype(jnp.bfloat16)   # (1, 4)
    b1 = params["b1"].astype(jnp.float32)    # (20, 1)
    b2 = params["b2"].astype(jnp.float32)    # (10, 1)
    b3 = params["b3"].astype(jnp.float32)    # (4, 1)
    b4 = params["b4"].astype(jnp.float32)    # (1, 1)

    l1, l2, l3 = w1.shape[0], w2.shape[0], w3.shape[0]

    def wspec(a):
        # Full-array block, constant index_map -> DMA'd once, VMEM-resident.
        return pl.BlockSpec(a.shape, lambda i: (0, 0))

    weight_bytes = sum(int(a.size) * a.dtype.itemsize
                       for a in (w1, b1, w2, b2, w3, b3, w4, b4))
    cost = pl.CostEstimate(
        flops=2 * B * (F * l1 + l1 * l2 + l2 * l3 + l3),
        transcendentals=B * (l1 + l2 + l3 + 1),
        bytes_accessed=B * F * x.dtype.itemsize + B * 4 + weight_bytes,
    )

    # VMEM budget: double-buffered x tile (300 lanes pad to 384) + in-kernel
    # bf16 copy / staging slack + weights/activations/output. Clamped so it
    # stays under v7x's 64 MiB physical VMEM (v5e/v6e have 128 MiB physical).
    lanes_padded = -(-F // 128) * 128
    est = (2 * tile * lanes_padded * x.dtype.itemsize      # x double buffer
           + 2 * tile * lanes_padded * 2                   # bf16 copy + staging
           + 4 * 1024 * 1024)                              # weights/acts/misc
    vmem_limit = int(min(max(est, 32 * 1024 * 1024), 56 * 1024 * 1024))

    out_row = pl.pallas_call(
        mlp_kernel,
        out_shape=jax.ShapeDtypeStruct((1, B), jnp.float32),
        grid=(n_tiles,),
        in_specs=[
            pl.BlockSpec((tile, F), lambda i: (i, 0)),     # stream x by batch tile
            wspec(w1), wspec(b1),
            wspec(w2), wspec(b2),
            wspec(w3), wspec(b3),
            wspec(w4), wspec(b4),
        ],
        out_specs=pl.BlockSpec((1, tile), lambda i: (0, i)),   # lane-dense row
        compiler_params=pltpu.CompilerParams(
            dimension_semantics=("parallel",),     # shard batch across v7x's 2 TCs
            vmem_limit_bytes=vmem_limit),
        cost_estimate=cost,
    )(x, w1, b1, w2, b2, w3, b3, w4, b4)

    # (1, B) lane-dense row -> (B, 1) column; B*4 bytes, negligible.
    return out_row.reshape(B, 1)


def init_params(key, input_nodes=300, layer1=20, layer2=10, layer3=4):
    """Mirrors the PyTorch module: weights ~ N(0, 0.01) in (out, in) orientation,
    biases ~ U(+-1/sqrt(fan_in)) stored as (out, 1) columns (lane-broadcast)."""
    ks = jax.random.split(key, 8)

    def w(k, fan_out, fan_in):
        return (0.01 * jax.random.normal(k, (fan_out, fan_in))).astype(jnp.float32)

    def b(k, fan_in, fan_out):
        bound = 1.0 / math.sqrt(float(fan_in))
        return jax.random.uniform(k, (fan_out, 1), minval=-bound,
                                  maxval=bound).astype(jnp.float32)

    return {
        "w1": w(ks[0], layer1, input_nodes), "b1": b(ks[1], input_nodes, layer1),
        "w2": w(ks[2], layer2, layer1),      "b2": b(ks[3], layer1, layer2),
        "w3": w(ks[4], layer3, layer2),      "b3": b(ks[5], layer2, layer3),
        "w4": w(ks[6], 1, layer3),           "b4": b(ks[7], layer3, 1),
    }


def reference_forward(x, params):
    """Pure-JAX f32 reference mirroring the kernel's bf16 operand rounding."""
    def r(a):
        return a.astype(jnp.bfloat16).astype(jnp.float32)
    h = jax.nn.sigmoid(r(x) @ r(params["w1"]).T + params["b1"].T)
    h = jax.nn.sigmoid(r(h) @ r(params["w2"]).T + params["b2"].T)
    h = jax.nn.sigmoid(r(h) @ r(params["w3"]).T + params["b3"].T)
    return jax.nn.sigmoid(r(h) @ r(params["w4"]).T + params["b4"].T)


if __name__ == "__main__":
    key = jax.random.PRNGKey(0)
    k_params, k_x1, k_x2 = jax.random.split(key, 3)

    INPUT_NODES = 300
    params = init_params(k_params, input_nodes=INPUT_NODES)

    # (1) Multi-tile + ragged last block: B=300 -> tile=256, grid=(2,).
    #     Exercises the pipelined f32 x stream, the parallel batch axis,
    #     lane-dense output blocks and the no-pad boundary-clipping path.
    x1 = jax.random.normal(k_x1, (300, INPUT_NODES), dtype=jnp.float32)
    out1 = jax.block_until_ready(neural_network_forward(x1, params))
    ref1 = reference_forward(x1, params)
    assert out1.shape == (300, 1), out1.shape
    assert jnp.allclose(out1, ref1, atol=2e-3, rtol=2e-3), \
        float(jnp.max(jnp.abs(out1 - ref1)))

    # (2) Tiny batch: B=10 -> single full-array block (no alignment needed).
    x2 = jax.random.normal(k_x2, (10, INPUT_NODES), dtype=jnp.float32)
    out2 = jax.block_until_ready(neural_network_forward(x2, params))
    ref2 = reference_forward(x2, params)
    assert out2.shape == (10, 1), out2.shape
    assert jnp.allclose(out2, ref2, atol=2e-3, rtol=2e-3), \
        float(jnp.max(jnp.abs(out2 - ref2)))

    print("KERNEL_OK")
</pallas_src>

<mosaic_0001>
module attributes {stable_mosaic.version = 11 : i64} {
  func.func @mlp_kernel(%arg0: i32, %arg1: memref<256x300xf32, #tpu.memory_space<vmem>>, %arg2: memref<20x300xbf16, #tpu.memory_space<vmem>>, %arg3: memref<20x1xf32, #tpu.memory_space<vmem>>, %arg4: memref<10x20xbf16, #tpu.memory_space<vmem>>, %arg5: memref<10x1xf32, #tpu.memory_space<vmem>>, %arg6: memref<4x10xbf16, #tpu.memory_space<vmem>>, %arg7: memref<4x1xf32, #tpu.memory_space<vmem>>, %arg8: memref<1x4xbf16, #tpu.memory_space<vmem>>, %arg9: memref<1x1xf32, #tpu.memory_space<vmem>>, %arg10: memref<1x256xf32, #tpu.memory_space<vmem>>) attributes {dimension_semantics = [#tpu.dimension_semantics<parallel>], iteration_bounds = array<i64: 2>, scalar_prefetch = 0 : i64, scratch_operands = 0 : i64, tpu.core_type = #tpu.core_type<tc>, window_params = [{transform_indices = @transform_0, window_bounds = array<i64: 256, 300>}, {pipeline_mode = #tpu.pipeline_mode<synchronous>, transform_indices = @transform_1, window_bounds = array<i64: 20, 300>}, {pipeline_mode = #tpu.pipeline_mode<synchronous>, transform_indices = @transform_2, window_bounds = array<i64: 20, 1>}, {pipeline_mode = #tpu.pipeline_mode<synchronous>, transform_indices = @transform_3, window_bounds = array<i64: 10, 20>}, {pipeline_mode = #tpu.pipeline_mode<synchronous>, transform_indices = @transform_4, window_bounds = array<i64: 10, 1>}, {pipeline_mode = #tpu.pipeline_mode<synchronous>, transform_indices = @transform_5, window_bounds = array<i64: 4, 10>}, {pipeline_mode = #tpu.pipeline_mode<synchronous>, transform_indices = @transform_6, window_bounds = array<i64: 4, 1>}, {pipeline_mode = #tpu.pipeline_mode<synchronous>, transform_indices = @transform_7, window_bounds = array<i64: 1, 4>}, {pipeline_mode = #tpu.pipeline_mode<synchronous>, transform_indices = @transform_8, window_bounds = array<i64: 1, 1>}, {transform_indices = @transform_9, window_bounds = array<i64: 1, 256>}]} {
    %c0 = arith.constant 0 : index
    %c0_0 = arith.constant 0 : index
    %0 = vector.load %arg1[%c0, %c0_0] : memref<256x300xf32, #tpu.memory_space<vmem>>, vector<256x300xf32>
    %1 = arith.truncf %0 : vector<256x300xf32> to vector<256x300xbf16>
    %c0_1 = arith.constant 0 : index
    %c0_2 = arith.constant 0 : index
    %2 = vector.load %arg2[%c0_1, %c0_2] : memref<20x300xbf16, #tpu.memory_space<vmem>>, vector<20x300xbf16>
    %cst = arith.constant dense<0.000000e+00> : vector<20x256xf32>
    %3 = tpu.matmul %2, %1, %cst {dimension_numbers = #tpu.dot_dimension_numbers<[1], [1], [0], [0], [0, 0, 1, 0], [], []>} : vector<20x300xbf16>, vector<256x300xbf16>, vector<20x256xf32> -> vector<20x256xf32>
    %c0_3 = arith.constant 0 : index
    %c0_4 = arith.constant 0 : index
    %4 = vector.load %arg3[%c0_3, %c0_4] : memref<20x1xf32, #tpu.memory_space<vmem>>, vector<20x1xf32>
    %5 = vector.broadcast %4 : vector<20x1xf32> to vector<20x256xf32>
    %6 = arith.addf %3, %5 : vector<20x256xf32>
    %7 = arith.negf %6 : vector<20x256xf32>
    %8 = math.exp %7 : vector<20x256xf32>
    %cst_5 = arith.constant 1.000000e+00 : f32
    %9 = vector.broadcast %cst_5 : f32 to vector<20x256xf32>
    %10 = arith.addf %9, %8 : vector<20x256xf32>
    %11 = arith.divf %9, %10 : vector<20x256xf32>
    %12 = arith.truncf %11 : vector<20x256xf32> to vector<20x256xbf16>
    %c0_6 = arith.constant 0 : index
    %c0_7 = arith.constant 0 : index
    %13 = vector.load %arg4[%c0_6, %c0_7] : memref<10x20xbf16, #tpu.memory_space<vmem>>, vector<10x20xbf16>
    %cst_8 = arith.constant dense<0.000000e+00> : vector<10x256xf32>
    %14 = tpu.matmul %13, %12, %cst_8 {dimension_numbers = #tpu.dot_dimension_numbers<[1], [0], [0], [1], [0, 0, 1, 1], [], []>} : vector<10x20xbf16>, vector<20x256xbf16>, vector<10x256xf32> -> vector<10x256xf32>
    %c0_9 = arith.constant 0 : index
    %c0_10 = arith.constant 0 : index
    %15 = vector.load %arg5[%c0_9, %c0_10] : memref<10x1xf32, #tpu.memory_space<vmem>>, vector<10x1xf32>
    %16 = vector.broadcast %15 : vector<10x1xf32> to vector<10x256xf32>
    %17 = arith.addf %14, %16 : vector<10x256xf32>
    %18 = arith.negf %17 : vector<10x256xf32>
    %19 = math.exp %18 : vector<10x256xf32>
    %cst_11 = arith.constant 1.000000e+00 : f32
    %20 = vector.broadcast %cst_11 : f32 to vector<10x256xf32>
    %21 = arith.addf %20, %19 : vector<10x256xf32>
    %22 = arith.divf %20, %21 : vector<10x256xf32>
    %23 = arith.truncf %22 : vector<10x256xf32> to vector<10x256xbf16>
    %c0_12 = arith.constant 0 : index
    %c0_13 = arith.constant 0 : index
    %24 = vector.load %arg6[%c0_12, %c0_13] : memref<4x10xbf16, #tpu.memory_space<vmem>>, vector<4x10xbf16>
    %cst_14 = arith.constant dense<0.000000e+00> : vector<4x256xf32>
    %25 = tpu.matmul %24, %23, %cst_14 {dimension_numbers = #tpu.dot_dimension_numbers<[1], [0], [0], [1], [0, 0, 1, 1], [], []>} : vector<4x10xbf16>, vector<10x256xbf16>, vector<4x256xf32> -> vector<4x256xf32>
    %c0_15 = arith.constant 0 : index
    %c0_16 = arith.constant 0 : index
    %26 = vector.load %arg7[%c0_15, %c0_16] : memref<4x1xf32, #tpu.memory_space<vmem>>, vector<4x1xf32>
    %27 = vector.broadcast %26 : vector<4x1xf32> to vector<4x256xf32>
    %28 = arith.addf %25, %27 : vector<4x256xf32>
    %29 = arith.negf %28 : vector<4x256xf32>
    %30 = math.exp %29 : vector<4x256xf32>
    %cst_17 = arith.constant 1.000000e+00 : f32
    %31 = vector.broadcast %cst_17 : f32 to vector<4x256xf32>
    %32 = arith.addf %31, %30 : vector<4x256xf32>
    %33 = arith.divf %31, %32 : vector<4x256xf32>
    %34 = arith.truncf %33 : vector<4x256xf32> to vector<4x256xbf16>
    %c0_18 = arith.constant 0 : index
    %c0_19 = arith.constant 0 : index
    %35 = vector.load %arg8[%c0_18, %c0_19] : memref<1x4xbf16, #tpu.memory_space<vmem>>, vector<1x4xbf16>
    %cst_20 = arith.constant dense<0.000000e+00> : vector<1x256xf32>
    %36 = tpu.matmul %35, %34, %cst_20 {dimension_numbers = #tpu.dot_dimension_numbers<[1], [0], [0], [1], [0, 0, 1, 1], [], []>} : vector<1x4xbf16>, vector<4x256xbf16>, vector<1x256xf32> -> vector<1x256xf32>
    %c0_21 = arith.constant 0 : index
    %c0_22 = arith.constant 0 : index
    %37 = vector.load %arg9[%c0_21, %c0_22] : memref<1x1xf32, #tpu.memory_space<vmem>>, vector<1x1xf32>
    %38 = vector.broadcast %37 : vector<1x1xf32> to vector<1x256xf32>
    %39 = arith.addf %36, %38 : vector<1x256xf32>
    %40 = arith.negf %39 : vector<1x256xf32>
    %41 = math.exp %40 : vector<1x256xf32>
    %cst_23 = arith.constant 1.000000e+00 : f32
    %42 = vector.broadcast %cst_23 : f32 to vector<1x256xf32>
    %43 = arith.addf %42, %41 : vector<1x256xf32>
    %44 = arith.divf %42, %43 : vector<1x256xf32>
    %c0_24 = arith.constant 0 : index
    %c0_25 = arith.constant 0 : index
    %45 = vector.load %arg10[%c0_24, %c0_25] : memref<1x256xf32, #tpu.memory_space<vmem>>, vector<1x256xf32>
    tpu.vector_store %arg10[%c0_24, %c0_25], %44 {strides = array<i32>} : memref<1x256xf32, #tpu.memory_space<vmem>>, vector<1x256xf32>,
    return
  }
  func.func @transform_0(%arg0: i32) -> (i32, i32) {
    %c0_i32 = arith.constant 0 : i32
    %c0_i32_0 = arith.constant 0 : i32
    return %arg0, %c0_i32 : i32, i32
  }
  func.func @transform_1(%arg0: i32) -> (i32, i32) {
    %c0_i32 = arith.constant 0 : i32
    %c0_i32_0 = arith.constant 0 : i32
    %c0_i32_1 = arith.constant 0 : i32
    return %c0_i32, %c0_i32_0 : i32, i32
  }
  func.func @transform_2(%arg0: i32) -> (i32, i32) {
    %c0_i32 = arith.constant 0 : i32
    %c0_i32_0 = arith.constant 0 : i32
    %c0_i32_1 = arith.constant 0 : i32
    return %c0_i32, %c0_i32_0 : i32, i32
  }
  func.func @transform_3(%arg0: i32) -> (i32, i32) {
    %c0_i32 = arith.constant 0 : i32
    %c0_i32_0 = arith.constant 0 : i32
    %c0_i32_1 = arith.constant 0 : i32
    return %c0_i32, %c0_i32_0 : i32, i32
  }
  func.func @transform_4(%arg0: i32) -> (i32, i32) {
    %c0_i32 = arith.constant 0 : i32
    %c0_i32_0 = arith.constant 0 : i32
    %c0_i32_1 = arith.constant 0 : i32
    return %c0_i32, %c0_i32_0 : i32, i32
  }
  func.func @transform_5(%arg0: i32) -> (i32, i32) {
    %c0_i32 = arith.constant 0 : i32
    %c0_i32_0 = arith.constant 0 : i32
    %c0_i32_1 = arith.constant 0 : i32
    return %c0_i32, %c0_i32_0 : i32, i32
  }
  func.func @transform_6(%arg0: i32) -> (i32, i32) {
    %c0_i32 = arith.constant 0 : i32
    %c0_i32_0 = arith.constant 0 : i32
    %c0_i32_1 = arith.constant 0 : i32
    return %c0_i32, %c0_i32_0 : i32, i32
  }
  func.func @transform_7(%arg0: i32) -> (i32, i32) {
    %c0_i32 = arith.constant 0 : i32
    %c0_i32_0 = arith.constant 0 : i32
    %c0_i32_1 = arith.constant 0 : i32
    return %c0_i32, %c0_i32_0 : i32, i32
  }
  func.func @transform_8(%arg0: i32) -> (i32, i32) {
    %c0_i32 = arith.constant 0 : i32
    %c0_i32_0 = arith.constant 0 : i32
    %c0_i32_1 = arith.constant 0 : i32
    return %c0_i32, %c0_i32_0 : i32, i32
  }
  func.func @transform_9(%arg0: i32) -> (i32, i32) {
    %c0_i32 = arith.constant 0 : i32
    %c0_i32_0 = arith.constant 0 : i32
    return %c0_i32, %arg0 : i32, i32
  }
}

</mosaic_0001>

<llo_original>
// kernel: tpu_custom_call.1
$region0: #{tpu_custom_call.1}
  #allocation0 [shape = 'u32[]', space=smem, size = 0x4, offset = 0x4, fixed_abs, tag = 'smem constant byte address 0x4 - core index']
  #allocation1 [shape = 'u32[144,128]{1,0:T(1,128)}', space=vmem, size = 0x12000, scoped, tag = 'internal scratch']
  #allocation2 [shape = 'f32[1,1]{1,0:T(1,128)S(1)}', space=vmem, size = 0x200, scoped, tag = 'scoped memory for tpu_custom_call.1']
  %s0 = inlined_call_operand.hbm [shape: f32[300,300], index: 0, kind: input, shape index: {}]
  %s1 = inlined_call_operand.vmem [shape: bf16[20,300], index: 1, kind: input, shape index: {}]
  %s2 = inlined_call_operand.vmem [shape: f32[20,1], index: 2, kind: input, shape index: {}]
  %s3 = inlined_call_operand.vmem [shape: bf16[10,20], index: 3, kind: input, shape index: {}]
  %s4 = inlined_call_operand.vmem [shape: f32[10,1], index: 4, kind: input, shape index: {}]
  %s5 = inlined_call_operand.vmem [shape: bf16[4,10], index: 5, kind: input, shape index: {}]
  %s6 = inlined_call_operand.vmem [shape: f32[4,1], index: 6, kind: input, shape index: {}]
  %s7 = inlined_call_operand.vmem [shape: bf16[1,4], index: 7, kind: input, shape index: {}]
  %s8 = inlined_call_operand.<no memory space> [shape: f32[1,1], index: 8, kind: input, shape index: {}]
  %s9 = inlined_call_operand.hbm [shape: f32[1,300], index: 9, kind: output, shape index: {}]
  %s10 = sld [smem:[#allocation0]]
  $region73: #{tpu_custom_call.1} parent=0
    _
  %s12 = ssub.s32 1, %s10
  %s13 = scalar_select 0, %s12, %s10
  %v14 = vstv %s8
  %15 = vst [vmem:[#allocation2] sm:$0x1] %v14
  $region1: #{tpu_custom_call.1} parent=0
    #allocation3 [shape = 'u8[786432]{0}', space=vmem, size = 0xc0000, scoped, tag = 'input window, operand 0']
    #allocation4 [shape = 's32[2]{0}', space=sflag, size = 0x8, scoped, tag = 'scoped memory for tpu_custom_call.1']
    #allocation5 [shape = 's32[2]{0}', space=sflag, size = 0x8, scoped, tag = 'scoped memory for tpu_custom_call.1']
    #allocation6 [shape = 'u8[2048]{0}', space=vmem, size = 0x800, scoped, tag = 'output window, operand 0']
    %16 = vsyncpa [#allocation4], 0
    %s17 = scalar_lea.sflag [#allocation4], 1
    %18 = vsyncpa %s17, 0
    %19 = vsyncpa [#allocation5], 0
    %s20 = scalar_lea.sflag [#allocation5], 1
    %21 = vsyncpa %s20, 0
    loop: start=0, step=1, limit=4
    $region2: #{tpu_custom_call.1} parent=1 // loop_pre_header
      _
    $region3: #{tpu_custom_call.1} parent=1 // loop_header
      %s23 = sphi 0, %s27
      %p24 = scmp.ge.s32.totalorder %s23, 4
      %s33 = sphi 0, %s35
      %s36 = sphi 0, %s33
      %s37 = sphi 0, %s36
      %s53 = sphi 0, %s37
      %s57 = sphi 0, %s57
      %s59 = sphi 0, %s57
      %s60 = sphi 0, %s59
      %s74 = sphi 0, %s60
      %s78 = sphi 0, %s78
      %s80 = sphi 0, %s78
      %s81 = sphi 0, %s80
      %s95 = sphi 0, %s81
      %s99 = sphi 0, %s99
      %s101 = sphi 0, %s99
      %s102 = sphi 0, %s101
      %s116 = sphi 0, %s102
      %s120 = sphi 0, %s120
      %s122 = sphi 0, %s120
      %s123 = sphi 0, %s122
      %s137 = sphi 0, %s123
      %s141 = sphi 0, %s141
      %s143 = sphi 0, %s141
      %s144 = sphi 0, %s143
      %s158 = sphi 0, %s144
      %s162 = sphi 0, %s162
      %s164 = sphi 0, %s162
      %s165 = sphi 0, %s164
      %s179 = sphi 0, %s165
      %s183 = sphi 0, %s183
      %s185 = sphi 0, %s183
      %s186 = sphi 0, %s185
      %s200 = sphi 0, %s186
      %s204 = sphi 0, %s204
      %s206 = sphi 0, %s204
      %s207 = sphi 0, %s206
      %s221 = sphi 0, %s207
      %s227 = sphi 0, %s229
      %s230 = sphi 0, %s227
      %s231 = sphi 0, %s230
      %s247 = sphi 0, %s231
    $region4: #{tpu_custom_call.1} parent=1 // loop_header_branch
      %26 = sbr.rel (%p24) target = $region8
    $region5: #{tpu_custom_call.1} parent=1 // loop_body
      %s28 = ssub.s32 %s23, 1
      %s29 = ssub.s32 %s23, 2
      %s30 = sadd.s32 %s23, 1
      %s31 = ssub.s32 %s23, %s30
      %p32 = scmp.eq.s32.totalorder %s31, 0
      %s34 = sadd.s32 %s33, 1
      %s35 = scalar_select %p32, %s33, %s34
      %p38 = pneg %p32
      %p39 = scmp.eq.s32.totalorder %s23, 1
      %p40 = por %p38, %p39
      %p41 = scmp.ne.s32.totalorder %s33, %s36
      %p42 = scmp.eq.s32.totalorder %s23, 0
      %p43 = por %p41, %p42
      %p44 = scmp.ne.s32.totalorder %s33, %s36
      %p45 = scmp.eq.s32.totalorder %s28, 1
      %p46 = por %p44, %p45
      %p47 = scmp.ne.s32.totalorder %s36, %s37
      %p48 = scmp.eq.s32.totalorder %s28, 0
      %p49 = por %p47, %p48
      %p50 = scmp.ne.s32.totalorder %s36, %s37
      %p51 = scmp.eq.s32.totalorder %s29, 1
      %p52 = por %p50, %p51
      %p54 = scmp.ne.s32.totalorder %s37, %s53
      %p55 = scmp.eq.s32.totalorder %s29, 0
      %p56 = por %p54, %p55
      %s58 = sadd.s32 %s57, 1
      %p61 = scmp.eq.s32.totalorder %s23, 1
      %p62 = scmp.ne.s32.totalorder %s57, %s59
      %p63 = scmp.eq.s32.totalorder %s23, 0
      %p64 = por %p62, %p63
      %p65 = scmp.ne.s32.totalorder %s57, %s59
      %p66 = scmp.eq.s32.totalorder %s28, 1
      %p67 = por %p65, %p66
      %p68 = scmp.ne.s32.totalorder %s59, %s60
      %p69 = scmp.eq.s32.totalorder %s28, 0
      %p70 = por %p68, %p69
      %p71 = scmp.ne.s32.totalorder %s59, %s60
      %p72 = scmp.eq.s32.totalorder %s29, 1
      %p73 = por %p71, %p72
      %p75 = scmp.ne.s32.totalorder %s60, %s74
      %p76 = scmp.eq.s32.totalorder %s29, 0
      %p77 = por %p75, %p76
      %s79 = sadd.s32 %s78, 1
      %p82 = scmp.eq.s32.totalorder %s23, 1
      %p83 = scmp.ne.s32.totalorder %s78, %s80
      %p84 = scmp.eq.s32.totalorder %s23, 0
      %p85 = por %p83, %p84
      %p86 = scmp.ne.s32.totalorder %s78, %s80
      %p87 = scmp.eq.s32.totalorder %s28, 1
      %p88 = por %p86, %p87
      %p89 = scmp.ne.s32.totalorder %s80, %s81
      %p90 = scmp.eq.s32.totalorder %s28, 0
      %p91 = por %p89, %p90
      %p92 = scmp.ne.s32.totalorder %s80, %s81
      %p93 = scmp.eq.s32.totalorder %s29, 1
      %p94 = por %p92, %p93
      %p96 = scmp.ne.s32.totalorder %s81, %s95
      %p97 = scmp.eq.s32.totalorder %s29, 0
      %p98 = por %p96, %p97
      %s100 = sadd.s32 %s99, 1
      %p103 = scmp.eq.s32.totalorder %s23, 1
      %p104 = scmp.ne.s32.totalorder %s99, %s101
      %p105 = scmp.eq.s32.totalorder %s23, 0
      %p106 = por %p104, %p105
      %p107 = scmp.ne.s32.totalorder %s99, %s101
      %p108 = scmp.eq.s32.totalorder %s28, 1
      %p109 = por %p107, %p108
      %p110 = scmp.ne.s32.totalorder %s101, %s102
      %p111 = scmp.eq.s32.totalorder %s28, 0
      %p112 = por %p110, %p111
      %p113 = scmp.ne.s32.totalorder %s101, %s102
      %p114 = scmp.eq.s32.totalorder %s29, 1
      %p115 = por %p113, %p114
      %p117 = scmp.ne.s32.totalorder %s102, %s116
      %p118 = scmp.eq.s32.totalorder %s29, 0
      %p119 = por %p117, %p118
      %s121 = sadd.s32 %s120, 1
      %p124 = scmp.eq.s32.totalorder %s23, 1
      %p125 = scmp.ne.s32.totalorder %s120, %s122
      %p126 = scmp.eq.s32.totalorder %s23, 0
      %p127 = por %p125, %p126
      %p128 = scmp.ne.s32.totalorder %s120, %s122
      %p129 = scmp.eq.s32.totalorder %s28, 1
      %p130 = por %p128, %p129
      %p131 = scmp.ne.s32.totalorder %s122, %s123
      %p132 = scmp.eq.s32.totalorder %s28, 0
      %p133 = por %p131, %p132
      %p134 = scmp.ne.s32.totalorder %s122, %s123
      %p135 = scmp.eq.s32.totalorder %s29, 1
      %p136 = por %p134, %p135
      %p138 = scmp.ne.s32.totalorder %s123, %s137
      %p139 = scmp.eq.s32.totalorder %s29, 0
      %p140 = por %p138, %p139
      %s142 = sadd.s32 %s141, 1
      %p145 = scmp.eq.s32.totalorder %s23, 1
      %p146 = scmp.ne.s32.totalorder %s141, %s143
      %p147 = scmp.eq.s32.totalorder %s23, 0
      %p148 = por %p146, %p147
      %p149 = scmp.ne.s32.totalorder %s141, %s143
      %p150 = scmp.eq.s32.totalorder %s28, 1
      %p151 = por %p149, %p150
      %p152 = scmp.ne.s32.totalorder %s143, %s144
      %p153 = scmp.eq.s32.totalorder %s28, 0
      %p154 = por %p152, %p153
      %p155 = scmp.ne.s32.totalorder %s143, %s144
      %p156 = scmp.eq.s32.totalorder %s29, 1
      %p157 = por %p155, %p156
      %p159 = scmp.ne.s32.totalorder %s144, %s158
      %p160 = scmp.eq.s32.totalorder %s29, 0
      %p161 = por %p159, %p160
      %s163 = sadd.s32 %s162, 1
      %p166 = scmp.eq.s32.totalorder %s23, 1
      %p167 = scmp.ne.s32.totalorder %s162, %s164
      %p168 = scmp.eq.s32.totalorder %s23, 0
      %p169 = por %p167, %p168
      %p170 = scmp.ne.s32.totalorder %s162, %s164
      %p171 = scmp.eq.s32.totalorder %s28, 1
      %p172 = por %p170, %p171
      %p173 = scmp.ne.s32.totalorder %s164, %s165
      %p174 = scmp.eq.s32.totalorder %s28, 0
      %p175 = por %p173, %p174
      %p176 = scmp.ne.s32.totalorder %s164, %s165
      %p177 = scmp.eq.s32.totalorder %s29, 1
      %p178 = por %p176, %p177
      %p180 = scmp.ne.s32.totalorder %s165, %s179
      %p181 = scmp.eq.s32.totalorder %s29, 0
      %p182 = por %p180, %p181
      %s184 = sadd.s32 %s183, 1
      %p187 = scmp.eq.s32.totalorder %s23, 1
      %p188 = scmp.ne.s32.totalorder %s183, %s185
      %p189 = scmp.eq.s32.totalorder %s23, 0
      %p190 = por %p188, %p189
      %p191 = scmp.ne.s32.totalorder %s183, %s185
      %p192 = scmp.eq.s32.totalorder %s28, 1
      %p193 = por %p191, %p192
      %p194 = scmp.ne.s32.totalorder %s185, %s186
      %p195 = scmp.eq.s32.totalorder %s28, 0
      %p196 = por %p194, %p195
      %p197 = scmp.ne.s32.totalorder %s185, %s186
      %p198 = scmp.eq.s32.totalorder %s29, 1
      %p199 = por %p197, %p198
      %p201 = scmp.ne.s32.totalorder %s186, %s200
      %p202 = scmp.eq.s32.totalorder %s29, 0
      %p203 = por %p201, %p202
      %s205 = sadd.s32 %s204, 1
      %p208 = scmp.eq.s32.totalorder %s23, 1
      %p209 = scmp.ne.s32.totalorder %s204, %s206
      %p210 = scmp.eq.s32.totalorder %s23, 0
      %p211 = por %p209, %p210
      %p212 = scmp.ne.s32.totalorder %s204, %s206
      %p213 = scmp.eq.s32.totalorder %s28, 1
      %p214 = por %p212, %p213
      %p215 = scmp.ne.s32.totalorder %s206, %s207
      %p216 = scmp.eq.s32.totalorder %s28, 0
      %p217 = por %p215, %p216
      %p218 = scmp.ne.s32.totalorder %s206, %s207
      %p219 = scmp.eq.s32.totalorder %s29, 1
      %p220 = por %p218, %p219
      %p222 = scmp.ne.s32.totalorder %s207, %s221
      %p223 = scmp.eq.s32.totalorder %s29, 0
      %p224 = por %p222, %p223
      %s225 = ssub.s32 %s23, %s30
      %p226 = scmp.eq.s32.totalorder %s225, 0
      %s228 = sadd.s32 %s227, 1
      %s229 = scalar_select %p226, %s227, %s228
      %p232 = pneg %p226
      %p233 = scmp.eq.s32.totalorder %s23, 1
      %p234 = por %p232, %p233
      %p235 = scmp.ne.s32.totalorder %s227, %s230
      %p236 = scmp.eq.s32.totalorder %s23, 0
      %p237 = por %p235, %p236
      %p238 = scmp.ne.s32.totalorder %s227, %s230
      %p239 = scmp.eq.s32.totalorder %s28, 1
      %p240 = por %p238, %p239
      %p241 = scmp.ne.s32.totalorder %s230, %s231
      %p242 = scmp.eq.s32.totalorder %s28, 0
      %p243 = por %p241, %p242
      %p244 = scmp.ne.s32.totalorder %s230, %s231
      %p245 = scmp.eq.s32.totalorder %s29, 1
      %p246 = por %p244, %p245
      %p248 = scmp.ne.s32.totalorder %s231, %s247
      %p249 = scmp.eq.s32.totalorder %s29, 0
      %p250 = por %p248, %p249
      %p251 = scmp.le.s32.totalorder 1, %s23
      %p252 = scmp.lt.s32.totalorder %s23, 3
      %p253 = pnand %p251, %p252
      %p254 = pneg %p253
      // Predicated region
      $region9: #{tpu_custom_call.1} parent=5 // pred_check
        _
      $region10: #{tpu_custom_call.1} parent=5 // pred_check_branch
        %256 = sbr.rel (%p253) target = $region12
      $region11: #{tpu_custom_call.1} parent=5 // pred_region
        %s257 = ssub.s32 %s23, 1
        // Predicated region
        $region13: #{tpu_custom_call.1} parent=11 // pred_check
          %p258 = pneg %p70
        $region14: #{tpu_custom_call.1} parent=11 // pred_check_branch
          %260 = sbr.rel (%p258) target = $region16
        $region15: #{tpu_custom_call.1} parent=11 // pred_region
          _
        $region16: #{tpu_custom_call.1} parent=11 // pred_fallthru
          _
        // Predicated region
        $region17: #{tpu_custom_call.1} parent=11 // pred_check
          %p261 = pneg %p91
        $region18: #{tpu_custom_call.1} parent=11 // pred_check_branch
          %263 = sbr.rel (%p261) target = $region20
        $region19: #{tpu_custom_call.1} parent=11 // pred_region
          _
        $region20: #{tpu_custom_call.1} parent=11 // pred_fallthru
          _
        // Predicated region
        $region21: #{tpu_custom_call.1} parent=11 // pred_check
          %p264 = pneg %p112
        $region22: #{tpu_custom_call.1} parent=11 // pred_check_branch
          %266 = sbr.rel (%p264) target = $region24
        $region23: #{tpu_custom_call.1} parent=11 // pred_region
          _
        $region24: #{tpu_custom_call.1} parent=11 // pred_fallthru
          _
        // Predicated region
        $region25: #{tpu_custom_call.1} parent=11 // pred_check
          %p267 = pneg %p133
        $region26: #{tpu_custom_call.1} parent=11 // pred_check_branch
          %269 = sbr.rel (%p267) target = $region28
        $region27: #{tpu_custom_call.1} parent=11 // pred_region
          _
        $region28: #{tpu_custom_call.1} parent=11 // pred_fallthru
          _
        // Predicated region
        $region29: #{tpu_custom_call.1} parent=11 // pred_check
          %p270 = pneg %p154
        $region30: #{tpu_custom_call.1} parent=11 // pred_check_branch
          %272 = sbr.rel (%p270) target = $region32
        $region31: #{tpu_custom_call.1} parent=11 // pred_region
          _
        $region32: #{tpu_custom_call.1} parent=11 // pred_fallthru
          _
        // Predicated region
        $region33: #{tpu_custom_call.1} parent=11 // pred_check
          %p273 = pneg %p175
        $region34: #{tpu_custom_call.1} parent=11 // pred_check_branch
          %275 = sbr.rel (%p273) target = $region36
        $region35: #{tpu_custom_call.1} parent=11 // pred_region
          _
        $region36: #{tpu_custom_call.1} parent=11 // pred_fallthru
          _
        // Predicated region
        $region37: #{tpu_custom_call.1} parent=11 // pred_check
          %p276 = pneg %p196
        $region38: #{tpu_custom_call.1} parent=11 // pred_check_branch
          %278 = sbr.rel (%p276) target = $region40
        $region39: #{tpu_custom_call.1} parent=11 // pred_region
          _
        $region40: #{tpu_custom_call.1} parent=11 // pred_fallthru
          _
        // Predicated region
        $region41: #{tpu_custom_call.1} parent=11 // pred_check
          %p279 = pneg %p217
        $region42: #{tpu_custom_call.1} parent=11 // pred_check_branch
          %281 = sbr.rel (%p279) target = $region44
        $region43: #{tpu_custom_call.1} parent=11 // pred_region
          _
        $region44: #{tpu_custom_call.1} parent=11 // pred_fallthru
          _
      $region12: #{tpu_custom_call.1} parent=5 // pred_fallthru
        _
      %p282 = scmp.lt.s32.totalorder %s23, 2
      // Predicated region
      $region45: #{tpu_custom_call.1} parent=5 // pred_check
        %p283 = pneg %p282
      $region46: #{tpu_custom_call.1} parent=5 // pred_check_branch
        %285 = sbr.rel (%p283) target = $region48
      $region47: #{tpu_custom_call.1} parent=5 // pred_region
        // Predicated region
        $region49: #{tpu_custom_call.1} parent=47 // pred_check
          %p286 = pneg %p43
        $region50: #{tpu_custom_call.1} parent=47 // pred_check_branch
          %288 = sbr.rel (%p286) target = $region52
        $region51: #{tpu_custom_call.1} parent=47 // pred_region
          %s289 = sand.u32 %s33, 1
          %s290 = scalar_lea.sflag [#allocation4], %s289
          %s291 = sand.u32 %s33, 1
          %s292 = smul.addr %s291, 768
          %s293 = scalar_lea.vmem [#allocation3], %s292
          %s294 = smul.u32 32, %s23
          %s295 = ssub.s32 38, %s294
          %p296 = scmp.lt.s32.totalorder %s295, 32
          %s297 = scalar_select %p296, %s295, 32
          %s298 = smul.u32 128, %s297
          %s299 = smul.u32 %s298, 3
          %s301 = ssub.s32 12288, %s299
          %302 = vsyncadd %s290, %s301
          %p303 = scmp.ne.s32.totalorder 0, %s299
          %s304 = smul.addr %s294, 3
          %s305 = smul.addr %s304, 128
          %s306 = scalar_lea.hbm %s0, %s305
          %s307 = smul.u32 24, %s297
          %s308 = sshll.u32 %s293, 4
          %s309 = int_to_ptr.vmem [resolvable:$true] %s308
          %s310 = sshll.u32 %s307, 4
          %314 = dma.hbm_to_vmem [thread:$0]  (%p303), %s306, %s310, %s309, %s290, 384, 384, 24
        $region52: #{tpu_custom_call.1} parent=47 // pred_fallthru
          _
      $region48: #{tpu_custom_call.1} parent=5 // pred_fallthru
        _
      %p315 = scmp.le.s32.totalorder 1, %s23
      %p316 = scmp.lt.s32.totalorder %s23, 3
      %p317 = pnand %p315, %p316
      %p318 = pneg %p317
      // Predicated region
      $region53: #{tpu_custom_call.1} parent=5 // pred_check
        _
      $region54: #{tpu_custom_call.1} parent=5 // pred_check_branch
        %320 = sbr.rel (%p317) target = $region56
      $region55: #{tpu_custom_call.1} parent=5 // pred_region
        %s321 = ssub.s32 %s23, 1
        %s322 = sand.u32 %s36, 1
        %s323 = scalar_lea.sflag [#allocation4], %s322
        %s324 = sand.u32 %s36, 1
        %s325 = smul.addr %s324, 768
        %s326 = scalar_lea.vmem [#allocation3], %s325
        // Predicated region
        $region57: #{tpu_custom_call.1} parent=55 // pred_check
          %p327 = pneg %p49
        $region58: #{tpu_custom_call.1} parent=55 // pred_check_branch
          %329 = sbr.rel (%p327) target = $region60
        $region59: #{tpu_custom_call.1} parent=55 // pred_region
          %330 = dma.done %s323, 12288
        $region60: #{tpu_custom_call.1} parent=55 // pred_fallthru
          _
        %s331 = sand.u32 %s36, 1
        %s332 = scalar_lea.sflag [#allocation4], %s331
        %s333 = sand.u32 %s36, 1
        %s334 = smul.addr %s333, 768
        %s335 = scalar_lea.vmem [#allocation3], %s334
        %p336 = pneg %p49
        %p337 = pneg %p46
        %p338 = pneg %p70
        %p339 = pneg %p67
        %p340 = pneg %p91
        %p341 = pneg %p88
        %p342 = pneg %p112
        %p343 = pneg %p109
        %p344 = pneg %p133
        %p345 = pneg %p130
        %p346 = pneg %p154
        %p347 = pneg %p151
        %p348 = pneg %p175
        %p349 = pneg %p172
        %p350 = pneg %p196
        %p351 = pneg %p193
        %p352 = pneg %p217
        %p353 = pneg %p214
        %p354 = pneg %p243
        %p355 = pneg %p240
        %s356 = sand.u32 %s230, 1
        %s357 = scalar_lea.sflag [#allocation5], %s356
        %s358 = sand.u32 %s230, 1
        %s359 = smul.addr %s358, 2
        %s360 = scalar_lea.vmem [#allocation6], %s359
        %s361 = smul.u32 32, %s28
        %s362 = ssub.s32 38, %s361
        %p363 = scmp.lt.s32.totalorder %s362, 32
        %s364 = scalar_select %p363, %s362, 32
        %s365 = smul.u32 128, %s364
        %s366 = smul.u32 %s365, 3
        %s367 = smul.u32 2, %s28
        %s368 = ssub.s32 3, %s367
        %p369 = scmp.lt.s32.totalorder %s368, 2
        %s370 = scalar_select %p369, %s368, 2
        %s371 = smul.u32 16, %s370
        %v373 = vld [vmem:[%s326] sm:$0xff]
        %v374 = vld [vmem:[%s326 + $0x8] sm:$0xff]
        %v375 = vld [vmem:[%s326 + $0x10] sm:$0xff]
        %v376 = vld [vmem:[%s326 + $0x18] sm:$0xff]
        %v377 = vld [vmem:[%s326 + $0x20] sm:$0xff]
        %v378 = vld [vmem:[%s326 + $0x28] sm:$0xff]
        %v379 = vld [vmem:[%s326 + $0x30] sm:$0xff]
        %v380 = vld [vmem:[%s326 + $0x38] sm:$0xff]
        %v381 = vld [vmem:[%s326 + $0x40] sm:$0xff]
        %v382 = vld [vmem:[%s326 + $0x48] sm:$0xff]
        %v383 = vld [vmem:[%s326 + $0x50] sm:$0xff]
        %v384 = vld [vmem:[%s326 + $0x58] sm:$0xff]
        %v385 = vld [vmem:[%s326 + $0x60] sm:$0xff]
        %v386 = vld [vmem:[%s326 + $0x68] sm:$0xff]
        %v387 = vld [vmem:[%s326 + $0x70] sm:$0xff]
        %v388 = vld [vmem:[%s326 + $0x78] sm:$0xff]
        %v389 = vld [vmem:[%s326 + $0x80] sm:$0xff]
        %v390 = vld [vmem:[%s326 + $0x88] sm:$0xff]
        %v391 = vld [vmem:[%s326 + $0x90] sm:$0xff]
        %v392 = vld [vmem:[%s326 + $0x98] sm:$0xff]
        %v393 = vld [vmem:[%s326 + $0xa0] sm:$0xff]
        %v394 = vld [vmem:[%s326 + $0xa8] sm:$0xff]
        %v395 = vld [vmem:[%s326 + $0xb0] sm:$0xff]
        %v396 = vld [vmem:[%s326 + $0xb8] sm:$0xff]
        %v397 = vld [vmem:[%s326 + $0xc0] sm:$0xff]
        %v398 = vld [vmem:[%s326 + $0xc8] sm:$0xff]
        %v399 = vld [vmem:[%s326 + $0xd0] sm:$0xff]
        %v400 = vld [vmem:[%s326 + $0xd8] sm:$0xff]
        %v401 = vld [vmem:[%s326 + $0xe0] sm:$0xff]
        %v402 = vld [vmem:[%s326 + $0xe8] sm:$0xff]
        %v403 = vld [vmem:[%s326 + $0xf0] sm:$0xff]
        %v404 = vld [vmem:[%s326 + $0xf8] sm:$0xff]
        %v405 = vld [vmem:[%s326 + $0x100] sm:$0xff]
        %v406 = vld [vmem:[%s326 + $0x108] sm:$0xff]
        %v407 = vld [vmem:[%s326 + $0x110] sm:$0xff]
        %v408 = vld [vmem:[%s326 + $0x118] sm:$0xff]
        %v409 = vld [vmem:[%s326 + $0x120] sm:$0xff]
        %v410 = vld [vmem:[%s326 + $0x128] sm:$0xff]
        %v411 = vld [vmem:[%s326 + $0x130] sm:$0xff]
        %v412 = vld [vmem:[%s326 + $0x138] sm:$0xff]
        %v413 = vld [vmem:[%s326 + $0x140] sm:$0xff]
        %v414 = vld [vmem:[%s326 + $0x148] sm:$0xff]
        %v415 = vld [vmem:[%s326 + $0x150] sm:$0xff]
        %v416 = vld [vmem:[%s326 + $0x158] sm:$0xff]
        %v417 = vld [vmem:[%s326 + $0x160] sm:$0xff]
        %v418 = vld [vmem:[%s326 + $0x168] sm:$0xff]
        %v419 = vld [vmem:[%s326 + $0x170] sm:$0xff]
        %v420 = vld [vmem:[%s326 + $0x178] sm:$0xff]
        %v421 = vld [vmem:[%s326 + $0x180] sm:$0xff]
        %v422 = vld [vmem:[%s326 + $0x188] sm:$0xff]
        %v423 = vld [vmem:[%s326 + $0x190] sm:$0xff]
        %v424 = vld [vmem:[%s326 + $0x198] sm:$0xff]
        %v425 = vld [vmem:[%s326 + $0x1a0] sm:$0xff]
        %v426 = vld [vmem:[%s326 + $0x1a8] sm:$0xff]
        %v427 = vld [vmem:[%s326 + $0x1b0] sm:$0xff]
        %v428 = vld [vmem:[%s326 + $0x1b8] sm:$0xff]
        %v429 = vld [vmem:[%s326 + $0x1c0] sm:$0xff]
        %v430 = vld [vmem:[%s326 + $0x1c8] sm:$0xff]
        %v431 = vld [vmem:[%s326 + $0x1d0] sm:$0xff]
        %v432 = vld [vmem:[%s326 + $0x1d8] sm:$0xff]
        %v433 = vld [vmem:[%s326 + $0x1e0] sm:$0xff]
        %v434 = vld [vmem:[%s326 + $0x1e8] sm:$0xff]
        %v435 = vld [vmem:[%s326 + $0x1f0] sm:$0xff]
        %v436 = vld [vmem:[%s326 + $0x1f8] sm:$0xff]
        %v437 = vld [vmem:[%s326 + $0x200] sm:$0xff]
        %v438 = vld [vmem:[%s326 + $0x208] sm:$0xff]
        %v439 = vld [vmem:[%s326 + $0x210] sm:$0xff]
        %v440 = vld [vmem:[%s326 + $0x218] sm:$0xff]
        %v441 = vld [vmem:[%s326 + $0x220] sm:$0xff]
        %v442 = vld [vmem:[%s326 + $0x228] sm:$0xff]
        %v443 = vld [vmem:[%s326 + $0x230] sm:$0xff]
        %v444 = vld [vmem:[%s326 + $0x238] sm:$0xff]
        %v445 = vld [vmem:[%s326 + $0x240] sm:$0xff]
        %v446 = vld [vmem:[%s326 + $0x248] sm:$0xff]
        %v447 = vld [vmem:[%s326 + $0x250] sm:$0xff]
        %v448 = vld [vmem:[%s326 + $0x258] sm:$0xff]
        %v449 = vld [vmem:[%s326 + $0x260] sm:$0xff]
        %v450 = vld [vmem:[%s326 + $0x268] sm:$0xff]
        %v451 = vld [vmem:[%s326 + $0x270] sm:$0xff]
        %v452 = vld [vmem:[%s326 + $0x278] sm:$0xff]
        %v453 = vld [vmem:[%s326 + $0x280] sm:$0xff]
        %v454 = vld [vmem:[%s326 + $0x288] sm:$0xff]
        %v455 = vld [vmem:[%s326 + $0x290] sm:$0xff]
        %v456 = vld [vmem:[%s326 + $0x298] sm:$0xff]
        %v457 = vld [vmem:[%s326 + $0x2a0] sm:$0xff]
        %v458 = vld [vmem:[%s326 + $0x2a8] sm:$0xff]
        %v459 = vld [vmem:[%s326 + $0x2b0] sm:$0xff]
        %v460 = vld [vmem:[%s326 + $0x2b8] sm:$0xff]
        %v461 = vld [vmem:[%s326 + $0x2c0] sm:$0xff]
        %v462 = vld [vmem:[%s326 + $0x2c8] sm:$0xff]
        %v463 = vld [vmem:[%s326 + $0x2d0] sm:$0xff]
        %v464 = vld [vmem:[%s326 + $0x2d8] sm:$0xff]
        %v465 = vld [vmem:[%s326 + $0x2e0] sm:$0xff]
        %v466 = vld [vmem:[%s326 + $0x2e8] sm:$0xff]
        %v467 = vld [vmem:[%s326 + $0x2f0] sm:$0xff]
        %v468 = vld [vmem:[%s326 + $0x2f8] sm:$0xff]
        %v469 = vpack.c.bf16 %v376, %v373
        %v470 = vpack.c.bf16 %v377, %v374
        %v471 = vpack.c.bf16 %v378, %v375
        %v472 = vpack.c.bf16 %v382, %v379
        %v473 = vpack.c.bf16 %v383, %v380
        %v474 = vpack.c.bf16 %v384, %v381
        %v475 = vpack.c.bf16 %v388, %v385
        %v476 = vpack.c.bf16 %v389, %v386
        %v477 = vpack.c.bf16 %v390, %v387
        %v478 = vpack.c.bf16 %v394, %v391
        %v479 = vpack.c.bf16 %v395, %v392
        %v480 = vpack.c.bf16 %v396, %v393
        %v481 = vpack.c.bf16 %v400, %v397
        %v482 = vpack.c.bf16 %v401, %v398
        %v483 = vpack.c.bf16 %v402, %v399
        %v484 = vpack.c.bf16 %v406, %v403
        %v485 = vpack.c.bf16 %v407, %v404
        %v486 = vpack.c.bf16 %v408, %v405
        %v487 = vpack.c.bf16 %v412, %v409
        %v488 = vpack.c.bf16 %v413, %v410
        %v489 = vpack.c.bf16 %v414, %v411
        %v490 = vpack.c.bf16 %v418, %v415
        %v491 = vpack.c.bf16 %v419, %v416
        %v492 = vpack.c.bf16 %v420, %v417
        %v493 = vpack.c.bf16 %v424, %v421
        %v494 = vpack.c.bf16 %v425, %v422
        %v495 = vpack.c.bf16 %v426, %v423
        %v496 = vpack.c.bf16 %v430, %v427
        %v497 = vpack.c.bf16 %v431, %v428
        %v498 = vpack.c.bf16 %v432, %v429
        %v499 = vpack.c.bf16 %v436, %v433
        %v500 = vpack.c.bf16 %v437, %v434
        %v501 = vpack.c.bf16 %v438, %v435
        %v502 = vpack.c.bf16 %v442, %v439
        %v503 = vpack.c.bf16 %v443, %v440
        %v504 = vpack.c.bf16 %v444, %v441
        %v505 = vpack.c.bf16 %v448, %v445
        %v506 = vpack.c.bf16 %v449, %v446
        %v507 = vpack.c.bf16 %v450, %v447
        %v508 = vpack.c.bf16 %v454, %v451
        %v509 = vpack.c.bf16 %v455, %v452
        %v510 = vpack.c.bf16 %v456, %v453
        %v511 = vpack.c.bf16 %v460, %v457
        %v512 = vpack.c.bf16 %v461, %v458
        %v513 = vpack.c.bf16 %v462, %v459
        %v514 = vpack.c.bf16 %v466, %v463
        %v515 = vpack.c.bf16 %v467, %v464
        %v516 = vpack.c.bf16 %v468, %v465
        %v517 = vld [vmem:[%s1] sm:$0xff]
        %v518 = vld [vmem:[%s1 + $0x8] sm:$0xf]
        %v519 = vld [vmem:[%s1 + $0xc] sm:$0xff]
        %v520 = vld [vmem:[%s1 + $0x14] sm:$0xf]
        %v521 = vld [vmem:[%s1 + $0x18] sm:$0x33]
        %v522 = vld [vmem:[%s1 + $0x20] sm:$0x3]
        %v523 = vld [vmem:[%s2] sm:$0xff]
        %v524 = vld [vmem:[%s2 + $0x8] sm:$0xff]
        %v525 = vld [vmem:[%s2 + $0x10] sm:$0xf]
        %527 = vset.pattern.permute.xlu0 0
        %528 = vperm.xlu0 %527, %v523
        %v529 = vpop.permute.xlu0 %528
        %532 = vset.pattern.permute.xlu0 0
        %533 = vperm.xlu0 %532, %v524
        %v534 = vpop.permute.xlu0 %533
        %537 = vset.pattern.permute.xlu0 0
        %538 = vperm.xlu0 %537, %v525
        %v539 = vpop.permute.xlu0 %538
        %v547 = vunpack.c.l.b16 %v517
        %v548 = vunpack.c.h.b16 %v517
        %v549 = vunpack.c.l.b16 %v518
        %v550 = vunpack.c.l.b16 %v519
        %v551 = vunpack.c.h.b16 %v519
        %v552 = vunpack.c.l.b16 %v520
        %v553 = vunpack.c.l.b16 %v521
        %v554 = vunpack.c.h.b16 %v521
        %v555 = vunpack.c.l.b16 %v522
        %v556 = vpack.c.b16 %v550, %v547
        %v557 = vpack.c.b16 %v551, %v548
        %v558 = vpack.c.b16 %v552, %v549
        %v559 = vpack.c.b16 %v553, %v553
        %v560 = vpack.c.b16 %v554, %v554
        %v561 = vpack.c.b16 %v555, %v555
        %vm566 = vcmask 359424
        %v568 = vsel %vm566, %v558, 0
        %v571 = vsel %vm566, %v561, 0
        %v574 = vsel %vm566, %v471, 0
        %v577 = vsel %vm566, %v474, 0
        %v580 = vsel %vm566, %v477, 0
        %v583 = vsel %vm566, %v480, 0
        %v586 = vsel %vm566, %v483, 0
        %v589 = vsel %vm566, %v486, 0
        %v592 = vsel %vm566, %v489, 0
        %v595 = vsel %vm566, %v492, 0
        %v598 = vsel %vm566, %v495, 0
        %v601 = vsel %vm566, %v498, 0
        %v604 = vsel %vm566, %v501, 0
        %v607 = vsel %vm566, %v504, 0
        %v610 = vsel %vm566, %v507, 0
        %v613 = vsel %vm566, %v510, 0
        %v616 = vsel %vm566, %v513, 0
        %v619 = vsel %vm566, %v516, 0
        %621 = vmatprep.subr.bf16.mxu0 %v470
        %622 = vmatpush1.bf16.xpose.msra.mxu0 %v469
        %623 = vmatprep.subr.bf16.mxu0 %v473
        %624 = vmatpush1.bf16.xpose.msra.mxu0 %v472
        %625 = vmatprep.subr.bf16.mxu0 %v476
        %626 = vmatpush1.bf16.xpose.msra.mxu0 %v475
        %627 = vmatprep.subr.bf16.mxu0 %v479
        %628 = vmatpush1.bf16.xpose.msra.mxu0 %v478
        %629 = vmatprep.subr.bf16.mxu0 %v482
        %630 = vmatpush1.bf16.xpose.msra.mxu0 %v481
        %631 = vmatprep.subr.bf16.mxu0 %v485
        %632 = vmatpush1.bf16.xpose.msra.mxu0 %v484
        %633 = vmatprep.subr.bf16.mxu0 %v488
        %634 = vmatpush1.bf16.xpose.msra.mxu0 %v487
        %635 = vmatprep.subr.bf16.mxu0 %v491
        %636 = vmatpush1.bf16.xpose.msra.mxu0 %v490
        %637 = vmatprep.subr.bf16.mxu0 %v494
        %638 = vmatpush1.bf16.xpose.msra.mxu0 %v493
        %639 = vmatprep.subr.bf16.mxu0 %v497
        %640 = vmatpush1.bf16.xpose.msra.mxu0 %v496
        %641 = vmatprep.subr.bf16.mxu0 %v500
        %642 = vmatpush1.bf16.xpose.msra.mxu0 %v499
        %643 = vmatprep.subr.bf16.mxu0 %v503
        %644 = vmatpush1.bf16.xpose.msra.mxu0 %v502
        %645 = vmatprep.subr.bf16.mxu0 %v506
        %646 = vmatpush1.bf16.xpose.msra.mxu0 %v505
        %647 = vmatprep.subr.bf16.mxu0 %v509
        %648 = vmatpush1.bf16.xpose.msra.mxu0 %v508
        %649 = vmatprep.subr.bf16.mxu0 %v512
        %650 = vmatpush1.bf16.xpose.msra.mxu0 %v511
        %651 = vmatprep.subr.bf16.mxu0 %v515
        %652 = vmatpush1.bf16.xpose.msra.mxu0 %v514
        %653 = vmatprep.mubr.bf16.mxu0 %v557
        %654 = vmatmul.mubr.bf16.gmra.mrb[0].mxu0 %v556
        %v655 = vpop.f32.mrb[0].mxu0
        %v656 = vadd.f32 %v529, %v655
        %v657 = vpop.f32.mrb[0].mxu0
        %v658 = vadd.f32 %v529, %v657
        %v659 = vpop.f32.mrb[0].mxu0
        %v660 = vadd.f32 %v534, %v659
        %v661 = vpop.f32.mrb[0].mxu0
        %v662 = vadd.f32 %v534, %v661
        %663 = vmatprep.mubr.bf16.mxu0 %v560
        %664 = vmatmul.mubr.bf16.gmra.mrb[0].mxu0 %v559
        %v665 = vpop.f32.mrb[0].mxu0
        %v666 = vadd.f32 %v539, %v665
        %v667 = vpop.f32.mrb[0].mxu0
        %v668 = vadd.f32 %v539, %v667
        %v669 = vpop.f32.mrb[0].mxu0
        %v670 = vpop.f32.mrb[0].mxu0
        %671 = vdwg.mxu0
        %672 = vmatprep.subr.bf16.mxu0 0
        %673 = vmatpush1.bf16.xpose.msra.mxu0 %v574
        %674 = vmatprep.subr.bf16.mxu0 0
        %675 = vmatpush1.bf16.xpose.msra.mxu0 %v577
        %676 = vmatprep.subr.bf16.mxu0 0
        %677 = vmatpush1.bf16.xpose.msra.mxu0 %v580
        %678 = vmatprep.subr.bf16.mxu0 0
        %679 = vmatpush1.bf16.xpose.msra.mxu0 %v583
        %680 = vmatprep.subr.bf16.mxu0 0
        %681 = vmatpush1.bf16.xpose.msra.mxu0 %v586
        %682 = vmatprep.subr.bf16.mxu0 0
        %683 = vmatpush1.bf16.xpose.msra.mxu0 %v589
        %684 = vmatprep.subr.bf16.mxu0 0
        %685 = vmatpush1.bf16.xpose.msra.mxu0 %v592
        %686 = vmatprep.subr.bf16.mxu0 0
        %687 = vmatpush1.bf16.xpose.msra.mxu0 %v595
        %688 = vmatprep.subr.bf16.mxu0 0
        %689 = vmatpush1.bf16.xpose.msra.mxu0 %v598
        %690 = vmatprep.subr.bf16.mxu0 0
        %691 = vmatpush1.bf16.xpose.msra.mxu0 %v601
        %692 = vmatprep.subr.bf16.mxu0 0
        %693 = vmatpush1.bf16.xpose.msra.mxu0 %v604
        %694 = vmatprep.subr.bf16.mxu0 0
        %695 = vmatpush1.bf16.xpose.msra.mxu0 %v607
        %696 = vmatprep.subr.bf16.mxu0 0
        %697 = vmatpush1.bf16.xpose.msra.mxu0 %v610
        %698 = vmatprep.subr.bf16.mxu0 0
        %699 = vmatpush1.bf16.xpose.msra.mxu0 %v613
        %700 = vmatprep.subr.bf16.mxu0 0
        %701 = vmatpush1.bf16.xpose.msra.mxu0 %v616
        %702 = vmatprep.subr.bf16.mxu0 0
        %703 = vmatpush1.bf16.xpose.msra.mxu0 %v619
        %704 = vmatprep.mubr.bf16.mxu0 0
        %705 = vmatmul.mubr.bf16.gmra.mrb[0].mxu0 %v568
        %v706 = vpop.f32.mrb[0].mxu0
        %v707 = vadd.f32 %v656, %v706
        %v708 = vpop.f32.mrb[0].mxu0
        %v709 = vadd.f32 %v658, %v708
        %v710 = vpop.f32.mrb[0].mxu0
        %v711 = vadd.f32 %v660, %v710
        %v712 = vpop.f32.mrb[0].mxu0
        %v713 = vadd.f32 %v662, %v712
        %714 = vmatprep.mubr.bf16.mxu0 0
        %715 = vmatmul.mubr.bf16.gmra.mrb[0].mxu0 %v571
        %v716 = vpop.f32.mrb[0].mxu0
        %v717 = vadd.f32 %v666, %v716
        %v718 = vpop.f32.mrb[0].mxu0
        %v719 = vadd.f32 %v668, %v718
        %v720 = vpop.f32.mrb[0].mxu0
        %v721 = vpop.f32.mrb[0].mxu0
        %722 = vdwg.mxu0
        %v723 = vxor.u32 %v707, 2147483648
        %v724 = vxor.u32 %v709, 2147483648
        %v725 = vxor.u32 %v711, 2147483648
        %v726 = vxor.u32 %v713, 2147483648
        %v727 = vxor.u32 %v717, 2147483648
        %v728 = vxor.u32 %v719, 2147483648
        %v729 = vmul.f32 %v723, 1.442695
        %v730 = vpow.pop %v729
        %v731 = vmul.f32 %v724, 1.442695
        %v732 = vpow.pop %v731
        %v733 = vmul.f32 %v725, 1.442695
        %v734 = vpow.pop %v733
        %v735 = vmul.f32 %v726, 1.442695
        %v736 = vpow.pop %v735
        %v737 = vmul.f32 %v727, 1.442695
        %v738 = vpow.pop %v737
        %v739 = vmul.f32 %v728, 1.442695
        %v740 = vpow.pop %v739
        %v741 = vadd.f32 %v730, 1.0
        %v742 = vadd.f32 %v732, 1.0
        %v743 = vadd.f32 %v734, 1.0
        %v744 = vadd.f32 %v736, 1.0
        %v745 = vadd.f32 %v738, 1.0
        %v746 = vadd.f32 %v740, 1.0
        %v747 = vrcp.pop %v741
        %v748 = vmul.f32 1.0, %v747
        %v749 = vrcp.pop %v742
        %v750 = vmul.f32 1.0, %v749
        %v751 = vrcp.pop %v743
        %v752 = vmul.f32 1.0, %v751
        %v753 = vrcp.pop %v744
        %v754 = vmul.f32 1.0, %v753
        %v755 = vrcp.pop %v745
        %v756 = vmul.f32 1.0, %v755
        %v757 = vrcp.pop %v746
        %v758 = vmul.f32 1.0, %v757
        %v759 = vpack.c.bf16 %v752, %v748
        %v760 = vpack.c.bf16 %v754, %v750
        %v761 = vpack.c.bf16 %v756, %v756
        %v762 = vpack.c.bf16 %v758, %v758
        %v763 = vld [vmem:[%s3] sm:$0xf]
        %v764 = vld [vmem:[%s3 + $0x4] sm:$0x1]
        %v765 = vld [vmem:[%s4] sm:$0xff]
        %v766 = vld [vmem:[%s4 + $0x8] sm:$0x3]
        %768 = vset.pattern.permute.xlu0 0
        %769 = vperm.xlu0 %768, %v765
        %v770 = vpop.permute.xlu0 %769
        %773 = vset.pattern.permute.xlu0 0
        %774 = vperm.xlu0 %773, %v766
        %v775 = vpop.permute.xlu0 %774
        %v779 = vunpack.c.l.b16 %v763
        %v780 = vunpack.c.l.b16 %v764
        %v781 = vpack.c.b16 %v780, %v779
        %vm782 = vcmask 162816
        %v784 = vsel %vm782, %v781, 0
        %vm786 = vcmask 1041408
        %v788 = vsel %vm786, %v761, 0
        %v791 = vsel %vm786, %v762, 0
        %793 = vmatprep.subr.bf16.mxu0 %v760
        %794 = vmatpush1.bf16.msra.mxu0 %v759
        %795 = vmatprep.subr.bf16.mxu0 %v791
        %796 = vmatpush1.bf16.msra.mxu0 %v788
        %797 = vmatprep.subr.bf16.mxu0 0
        %798 = vmatpush1.bf16.msra.mxu0 0
        %799 = vmatprep.subr.bf16.mxu0 0
        %800 = vmatpush1.bf16.msra.mxu0 0
        %801 = vmatprep.subr.bf16.mxu0 0
        %802 = vmatpush1.bf16.msra.mxu0 0
        %803 = vmatprep.subr.bf16.mxu0 0
        %804 = vmatpush1.bf16.msra.mxu0 0
        %805 = vmatprep.subr.bf16.mxu0 0
        %806 = vmatpush1.bf16.msra.mxu0 0
        %807 = vmatprep.subr.bf16.mxu0 0
        %808 = vmatpush1.bf16.msra.mxu0 0
        %809 = vmatprep.subr.bf16.mxu0 0
        %810 = vmatpush1.bf16.msra.mxu0 0
        %811 = vmatprep.subr.bf16.mxu0 0
        %812 = vmatpush1.bf16.msra.mxu0 0
        %813 = vmatprep.subr.bf16.mxu0 0
        %814 = vmatpush1.bf16.msra.mxu0 0
        %815 = vmatprep.subr.bf16.mxu0 0
        %816 = vmatpush1.bf16.msra.mxu0 0
        %817 = vmatprep.subr.bf16.mxu0 0
        %818 = vmatpush1.bf16.msra.mxu0 0
        %819 = vmatprep.subr.bf16.mxu0 0
        %820 = vmatpush1.bf16.msra.mxu0 0
        %821 = vmatprep.subr.bf16.mxu0 0
        %822 = vmatpush1.bf16.msra.mxu0 0
        %823 = vmatprep.subr.bf16.mxu0 0
        %824 = vmatpush1.bf16.msra.mxu0 0
        %825 = vmatprep.mubr.bf16.mxu0 0
        %826 = vmatmul.mubr.bf16.gmra.mrb[0].mxu0 %v784
        %v827 = vpop.f32.mrb[0].mxu0
        %v828 = vadd.f32 %v770, %v827
        %v829 = vpop.f32.mrb[0].mxu0
        %v830 = vadd.f32 %v770, %v829
        %v831 = vpop.f32.mrb[0].mxu0
        %v832 = vadd.f32 %v775, %v831
        %v833 = vpop.f32.mrb[0].mxu0
        %v834 = vadd.f32 %v775, %v833
        %835 = vdwg.mxu0
        %v836 = vxor.u32 %v828, 2147483648
        %v837 = vxor.u32 %v830, 2147483648
        %v838 = vxor.u32 %v832, 2147483648
        %v839 = vxor.u32 %v834, 2147483648
        %v840 = vmul.f32 %v836, 1.442695
        %v841 = vpow.pop %v840
        %v842 = vmul.f32 %v837, 1.442695
        %v843 = vpow.pop %v842
        %v844 = vmul.f32 %v838, 1.442695
        %v845 = vpow.pop %v844
        %v846 = vmul.f32 %v839, 1.442695
        %v847 = vpow.pop %v846
        %v848 = vadd.f32 %v841, 1.0
        %v849 = vadd.f32 %v843, 1.0
        %v850 = vadd.f32 %v845, 1.0
        %v851 = vadd.f32 %v847, 1.0
        %v852 = vrcp.pop %v848
        %v853 = vmul.f32 1.0, %v852
        %v854 = vrcp.pop %v849
        %v855 = vmul.f32 1.0, %v854
        %v856 = vrcp.pop %v850
        %v857 = vmul.f32 1.0, %v856
        %v858 = vrcp.pop %v851
        %v859 = vmul.f32 1.0, %v858
        %v860 = vpack.c.bf16 %v857, %v853
        %v861 = vpack.c.bf16 %v859, %v855
        %v862 = vld [vmem:[%s5] sm:$0x3]
        %v863 = vld [vmem:[%s6] sm:$0xf]
        %865 = vset.pattern.permute.xlu0 0
        %866 = vperm.xlu0 %865, %v863
        %v867 = vpop.permute.xlu0 %866
        %vm869 = vcmask 80896
        %v871 = vsel %vm869, %v862, 0
        %vm873 = vcmask 1044480
        %v875 = vsel %vm873, %v860, 0
        %v878 = vsel %vm873, %v861, 0
        %880 = vmatprep.subr.bf16.mxu0 %v878
        %881 = vmatpush1.bf16.msra.mxu0 %v875
        %882 = vmatprep.subr.bf16.mxu0 0
        %883 = vmatpush1.bf16.msra.mxu0 0
        %884 = vmatprep.subr.bf16.mxu0 0
        %885 = vmatpush1.bf16.msra.mxu0 0
        %886 = vmatprep.subr.bf16.mxu0 0
        %887 = vmatpush1.bf16.msra.mxu0 0
        %888 = vmatprep.subr.bf16.mxu0 0
        %889 = vmatpush1.bf16.msra.mxu0 0
        %890 = vmatprep.subr.bf16.mxu0 0
        %891 = vmatpush1.bf16.msra.mxu0 0
        %892 = vmatprep.subr.bf16.mxu0 0
        %893 = vmatpush1.bf16.msra.mxu0 0
        %894 = vmatprep.subr.bf16.mxu0 0
        %895 = vmatpush1.bf16.msra.mxu0 0
        %896 = vmatprep.subr.bf16.mxu0 0
        %897 = vmatpush1.bf16.msra.mxu0 0
        %898 = vmatprep.subr.bf16.mxu0 0
        %899 = vmatpush1.bf16.msra.mxu0 0
        %900 = vmatprep.subr.bf16.mxu0 0
        %901 = vmatpush1.bf16.msra.mxu0 0
        %902 = vmatprep.subr.bf16.mxu0 0
        %903 = vmatpush1.bf16.msra.mxu0 0
        %904 = vmatprep.subr.bf16.mxu0 0
        %905 = vmatpush1.bf16.msra.mxu0 0
        %906 = vmatprep.subr.bf16.mxu0 0
        %907 = vmatpush1.bf16.msra.mxu0 0
        %908 = vmatprep.subr.bf16.mxu0 0
        %909 = vmatpush1.bf16.msra.mxu0 0
        %910 = vmatprep.subr.bf16.mxu0 0
        %911 = vmatpush1.bf16.msra.mxu0 0
        %912 = vmatprep.mubr.bf16.mxu0 0
        %913 = vmatmul.mubr.bf16.gmra.mrb[0].mxu0 %v871
        %v914 = vpop.f32.mrb[0].mxu0
        %v915 = vadd.f32 %v867, %v914
        %v916 = vpop.f32.mrb[0].mxu0
        %v917 = vadd.f32 %v867, %v916
        %v918 = vpop.f32.mrb[0].mxu0
        %v919 = vpop.f32.mrb[0].mxu0
        %920 = vdwg.mxu0
        %v921 = vxor.u32 %v915, 2147483648
        %v922 = vxor.u32 %v917, 2147483648
        %v923 = vmul.f32 %v921, 1.442695
        %v924 = vpow.pop %v923
        %v925 = vmul.f32 %v922, 1.442695
        %v926 = vpow.pop %v925
        %v927 = vadd.f32 %v924, 1.0
        %v928 = vadd.f32 %v926, 1.0
        %v929 = vrcp.pop %v927
        %v930 = vmul.f32 1.0, %v929
        %v931 = vrcp.pop %v928
        %v932 = vmul.f32 1.0, %v931
        %v933 = vpack.c.bf16 %v930, %v930
        %v934 = vpack.c.bf16 %v932, %v932
        %v935 = vld [vmem:[%s7] sm:$0x1]
        %v936 = vld [vmem:[#allocation2] sm:$0x1]
        %938 = vset.pattern.permute.xlu0 0
        %939 = vperm.xlu0 %938, %v936
        %v940 = vpop.permute.xlu0 %939
        %v942 = vlaneseq
        %v943 = vshrl.u32 %v942, 7
        %v944 = vsub.s32 0, %v943
        %v945 = vrot.slane %v940, %v944
        %vm946 = vcmask 31744
        %v948 = vsel %vm946, %v935, 0
        %v951 = vsel %vm786, %v933, 0
        %v954 = vsel %vm786, %v934, 0
        %956 = vmatprep.subr.bf16.mxu0 %v954
        %957 = vmatpush1.bf16.msra.mxu0 %v951
        %958 = vmatprep.subr.bf16.mxu0 0
        %959 = vmatpush1.bf16.msra.mxu0 0
        %960 = vmatprep.subr.bf16.mxu0 0
        %961 = vmatpush1.bf16.msra.mxu0 0
        %962 = vmatprep.subr.bf16.mxu0 0
        %963 = vmatpush1.bf16.msra.mxu0 0
        %964 = vmatprep.subr.bf16.mxu0 0
        %965 = vmatpush1.bf16.msra.mxu0 0
        %966 = vmatprep.subr.bf16.mxu0 0
        %967 = vmatpush1.bf16.msra.mxu0 0
        %968 = vmatprep.subr.bf16.mxu0 0
        %969 = vmatpush1.bf16.msra.mxu0 0
        %970 = vmatprep.subr.bf16.mxu0 0
        %971 = vmatpush1.bf16.msra.mxu0 0
        %972 = vmatprep.subr.bf16.mxu0 0
        %973 = vmatpush1.bf16.msra.mxu0 0
        %974 = vmatprep.subr.bf16.mxu0 0
        %975 = vmatpush1.bf16.msra.mxu0 0
        %976 = vmatprep.subr.bf16.mxu0 0
        %977 = vmatpush1.bf16.msra.mxu0 0
        %978 = vmatprep.subr.bf16.mxu0 0
        %979 = vmatpush1.bf16.msra.mxu0 0
        %980 = vmatprep.subr.bf16.mxu0 0
        %981 = vmatpush1.bf16.msra.mxu0 0
        %982 = vmatprep.subr.bf16.mxu0 0
        %983 = vmatpush1.bf16.msra.mxu0 0
        %984 = vmatprep.subr.bf16.mxu0 0
        %985 = vmatpush1.bf16.msra.mxu0 0
        %986 = vmatprep.subr.bf16.mxu0 0
        %987 = vmatpush1.bf16.msra.mxu0 0
        %988 = vmatprep.mubr.bf16.mxu0 0
        %989 = vmatmul.mubr.bf16.gmra.mrb[0].mxu0 %v948
        %v990 = vpop.f32.mrb[0].mxu0
        %v991 = vadd.f32 %v945, %v990
        %v992 = vpop.f32.mrb[0].mxu0
        %v993 = vadd.f32 %v945, %v992
        %v994 = vpop.f32.mrb[0].mxu0
        %v995 = vpop.f32.mrb[0].mxu0
        %996 = vdwg.mxu0
        %v997 = vxor.u32 %v991, 2147483648
        %v998 = vxor.u32 %v993, 2147483648
        %v999 = vmul.f32 %v997, 1.442695
        %v1000 = vpow.pop %v999
        %v1001 = vmul.f32 %v998, 1.442695
        %v1002 = vpow.pop %v1001
        %v1003 = vadd.f32 %v1000, 1.0
        %v1004 = vadd.f32 %v1002, 1.0
        %v1005 = vrcp.pop %v1003
        %v1006 = vmul.f32 1.0, %v1005
        %v1007 = vrcp.pop %v1004
        %v1008 = vmul.f32 1.0, %v1007
        %v1011 = vcombine.low %v1006, %v1008
        %v1013 = vunpack.c.l.s4 1966171168
        %v1014 = vunpack.c.0.s8 %v1013
        %v1015 = vlaneseq
        %v1016 = vshrl.u32 %v1015, 7
        %v1017 = vsub.s32 %v1014, %v1016
        %v1018 = vrot.slane %v1011, %v1017
        %v1020 = vunpack.c.l.s4 1966171168
        %v1021 = vunpack.c.0.s8 %v1020
        %v1022 = vlaneseq
        %v1023 = vshrl.u32 %v1022, 7
        %v1024 = vsub.s32 %v1021, %v1023
        %v1025 = vrot.slane %v1018, %v1024
        %v1027 = vlaneseq
        %vm1028 = vcmp.ge.s32.totalorder %v1027, 0
        %vm1029 = vcmp.lt.s32.totalorder %v1027, 256
        %vm1030 = vmand %vm1028, %vm1029
        %1031 = vst.msk [vmem:[%s360] sm:$0x3] %vm1030, %v1025
        %s1032 = sand.u32 %s230, 1
        %s1033 = scalar_lea.sflag [#allocation5], %s1032
        %s1034 = sand.u32 %s230, 1
        %s1035 = smul.addr %s1034, 2
        %s1036 = scalar_lea.vmem [#allocation6], %s1035
        // Predicated region
        $region61: #{tpu_custom_call.1} parent=55 // pred_check
          %p1037 = pneg %p240
        $region62: #{tpu_custom_call.1} parent=55 // pred_check_branch
          %1039 = sbr.rel (%p1037) target = $region64
        $region63: #{tpu_custom_call.1} parent=55 // pred_region
          %s1040 = smul.u32 2, %s28
          %s1041 = ssub.s32 3, %s1040
          %p1042 = scmp.lt.s32.totalorder %s1041, 2
          %s1043 = scalar_select %p1042, %s1041, 2
          %s1044 = smul.u32 16, %s1043
          %s1046 = ssub.s32 32, %s1044
          %1047 = vsyncadd %s1033, %s1046
          %p1048 = scmp.ne.s32.totalorder 0, %s1044
          %s1049 = smul.addr %s1040, 16
          %s1050 = scalar_lea.hbm %s9, %s1049
          %s1051 = sshll.u32 %s1043, 4
          %s1052 = sshll.u32 %s1036, 4
          %s1053 = int_to_ptr.vmem [resolvable:$true] %s1052
          %1055 = dma.vmem_to_hbm [thread:$0]  (%p1048), %s1053, %s1051, %s1050, %s1033
        $region64: #{tpu_custom_call.1} parent=55 // pred_fallthru
          _
      $region56: #{tpu_custom_call.1} parent=5 // pred_fallthru
        _
      %p1056 = scmp.le.s32.totalorder 2, %s23
      // Predicated region
      $region65: #{tpu_custom_call.1} parent=5 // pred_check
        %p1057 = pneg %p1056
      $region66: #{tpu_custom_call.1} parent=5 // pred_check_branch
        %1059 = sbr.rel (%p1057) target = $region68
      $region67: #{tpu_custom_call.1} parent=5 // pred_region
        %s1060 = ssub.s32 %s23, 2
        // Predicated region
        $region69: #{tpu_custom_call.1} parent=67 // pred_check
          %p1061 = pneg %p246
        $region70: #{tpu_custom_call.1} parent=67 // pred_check_branch
          %1063 = sbr.rel (%p1061) target = $region72
        $region71: #{tpu_custom_call.1} parent=67 // pred_region
          %s1064 = sand.u32 %s231, 1
          %s1065 = scalar_lea.sflag [#allocation5], %s1064
          %s1066 = sand.u32 %s231, 1
          %s1067 = smul.addr %s1066, 2
          %s1068 = scalar_lea.vmem [#allocation6], %s1067
          %1069 = dma.done %s1065, 32
        $region72: #{tpu_custom_call.1} parent=67 // pred_fallthru
          _
      $region68: #{tpu_custom_call.1} parent=5 // pred_fallthru
        _
    $region6: #{tpu_custom_call.1} parent=1 // loop_footer
      %s27 = sadd.s32 1, %s23
    $region7: #{tpu_custom_call.1} parent=1 // loop_footer_branch
      %22 = sbr.rel target = $region3
    $region8: #{tpu_custom_call.1} parent=1 // loop_exit
      _
    %1070 = vsyncpa [#allocation4], 1
    %s1071 = scalar_lea.sflag [#allocation4], 1
    %1072 = vsyncpa %s1071, 1
    %1073 = vsyncpa [#allocation5], 1
    %s1074 = scalar_lea.sflag [#allocation5], 1
    %1075 = vsyncpa %s1074, 1

</llo_original>
